<compile_context>
chip_gen: v7x
topology: tpu7x:2x2x1
jax: 0.10.0
libtpu: 0.0.40
codegen_flags: <defaults>
</compile_context>

<pallas_src>
import functools

import jax
import jax.numpy as jnp
from jax.experimental import pallas as pl

HIDDEN = 32

# Packed-parameter row layout inside the (8, HIDDEN) block:
#   rows 0:3 -> w1x^T (3, HIDDEN)   first-layer weights for xyz
#   rows 3:6 -> w1r^T (3, HIDDEN)   first-layer weights for rgb
#   row  6   -> b1    (1, HIDDEN)   first-layer bias
#   row  7   -> w2    (1, HIDDEN)   second-layer (scalar head) weights
_W1X, _W1R, _B1, _W2 = slice(0, 3), slice(3, 6), slice(6, 7), slice(7, 8)


def _pos_head_kernel(xyz_ref, rgb_ref, p_ref, out_ref, *, batch, n_points):
    # xyz_ref / rgb_ref: (B, N, 3) whole arrays resident in VMEM (no grid)
    # p_ref            : (8, HIDDEN) packed parameter block (layout above)
    # out_ref          : (B, 3)
    npts = batch * n_points
    x = xyz_ref[...].reshape(npts, 3)        # merge leading dims (N % 8 == 0)
    r = rgb_ref[...].reshape(npts, 3)

    w1x = p_ref[_W1X, :]                     # (3, HIDDEN)
    w1r = p_ref[_W1R, :]                     # (3, HIDDEN)
    b1 = p_ref[_B1, :]                       # (1, HIDDEN)
    w2 = p_ref[_W2, :]                       # (1, HIDDEN)

    # Per-point MLP (stand-in for the SE3Backbone scalar feature head).
    h = jnp.dot(x, w1x, preferred_element_type=jnp.float32)
    h = h + jnp.dot(r, w1r, preferred_element_type=jnp.float32)
    h = jnp.maximum(h + b1, 0.0)                               # (npts, HIDDEN)
    s = jnp.sum(h * w2, axis=1, keepdims=True)                 # (npts, 1) scores

    # Per-batch softmax over points + softmax-weighted position:
    #   pos_weight = softmax(feature_i); output_pos[i] = sum_n xyz_i[n] * w[n]
    rows = []
    for b in range(batch):                   # tiny static unroll (B == 2)
        lo = b * n_points
        s_b = s[lo:lo + n_points, :]                           # (N, 1)
        m = jnp.max(s_b, axis=0, keepdims=True)
        e = jnp.exp(s_b - m)
        w_b = e / jnp.sum(e, axis=0, keepdims=True)            # exact divide
        x_b = x[lo:lo + n_points, :]                           # (N, 3)
        rows.append(jnp.sum(x_b * w_b, axis=0, keepdims=True))  # (1, 3)
    out_ref[...] = jnp.concatenate(rows, axis=0)               # (B, 3)


def model_forward(xyz, rgb, packed_params):
    """xyz, rgb: (B, N, 3) float32.  Returns output_pos: (B, 3) float32."""
    B, N, _ = xyz.shape
    # No grid, no wrapper layout ops: one program, three whole-array VMEM
    # operands, one (B, 3) output.
    # TODO(synk): when N grows, tile the point axis (grid + online softmax in
    #             VMEM scratch) and add a "parallel" batch axis for v7x's 2 TCs.
    return pl.pallas_call(
        functools.partial(_pos_head_kernel, batch=B, n_points=N),
        out_shape=jax.ShapeDtypeStruct((B, 3), jnp.float32),
    )(xyz, rgb, packed_params)


def reference_forward(xyz, rgb, packed_params):
    """Pure-JAX reference of the same semantics for correctness checking."""
    w1x = packed_params[_W1X]                # (3, HIDDEN)
    w1r = packed_params[_W1R]                # (3, HIDDEN)
    b1 = packed_params[_B1][0]               # (HIDDEN,)
    w2 = packed_params[_W2][0]               # (HIDDEN,)
    h = (jnp.einsum("bnk,kh->bnh", xyz, w1x)
         + jnp.einsum("bnk,kh->bnh", rgb, w1r) + b1)
    h = jnp.maximum(h, 0.0)
    s = jnp.einsum("bnh,h->bn", h, w2)                 # (B, N) per-point score
    w = jax.nn.softmax(s, axis=1)                      # softmax over points
    return jnp.einsum("bn,bnd->bd", w, xyz)            # (B, 3)


def init_params(key):
    k1, k2, k3 = jax.random.split(key, 3)
    w1x = jax.random.normal(k1, (3, HIDDEN), jnp.float32) * 0.1
    w1r = jax.random.normal(k2, (3, HIDDEN), jnp.float32) * 0.1
    b1 = jnp.zeros((1, HIDDEN), jnp.float32)
    w2 = jax.random.normal(k3, (1, HIDDEN), jnp.float32) * 0.1
    # Pack once at init time -> a single parameter operand / DMA at call time.
    return jnp.concatenate([w1x, w1r, b1, w2], axis=0)   # (8, HIDDEN)


if __name__ == "__main__":
    key = jax.random.PRNGKey(0)
    kx, kr, kp = jax.random.split(key, 3)

    B, N = 2, 64
    xyz = jax.random.uniform(kx, (B, N, 3), jnp.float32)     # point positions
    rgb = jax.random.uniform(kr, (B, N, 3), jnp.float32)     # point colors
    params = init_params(kp)

    out = jax.block_until_ready(model_forward(xyz, rgb, params))

    ref = reference_forward(xyz, rgb, params)
    assert out.shape == (B, 3)
    assert jnp.allclose(out, ref, atol=1e-5, rtol=1e-5), (out, ref)

    print("KERNEL_OK")
</pallas_src>

<mosaic_0001>
module attributes {stable_mosaic.version = 11 : i64} {
  func.func @_pos_head_kernel(%arg0: memref<2x64x3xf32, #tpu.memory_space<vmem>>, %arg1: memref<2x64x3xf32, #tpu.memory_space<vmem>>, %arg2: memref<8x32xf32, #tpu.memory_space<vmem>>, %arg3: memref<2x3xf32, #tpu.memory_space<vmem>>) attributes {dimension_semantics = [], scalar_prefetch = 0 : i64, scratch_operands = 0 : i64, tpu.core_type = #tpu.core_type<tc>} {
    %c0 = arith.constant 0 : index
    %c0_0 = arith.constant 0 : index
    %c0_1 = arith.constant 0 : index
    %0 = vector.load %arg0[%c0, %c0_0, %c0_1] : memref<2x64x3xf32, #tpu.memory_space<vmem>>, vector<2x64x3xf32>
    %1 = vector.shape_cast %0 : vector<2x64x3xf32> to vector<128x3xf32>
    %c0_2 = arith.constant 0 : index
    %c0_3 = arith.constant 0 : index
    %c0_4 = arith.constant 0 : index
    %2 = vector.load %arg1[%c0_2, %c0_3, %c0_4] : memref<2x64x3xf32, #tpu.memory_space<vmem>>, vector<2x64x3xf32>
    %3 = vector.shape_cast %2 : vector<2x64x3xf32> to vector<128x3xf32>
    %c0_5 = arith.constant 0 : index
    %c0_6 = arith.constant 0 : index
    %4 = vector.load %arg2[%c0_5, %c0_6] : memref<8x32xf32, #tpu.memory_space<vmem>>, vector<3x32xf32>
    %c3 = arith.constant 3 : index
    %c0_7 = arith.constant 0 : index
    %5 = vector.load %arg2[%c3, %c0_7] : memref<8x32xf32, #tpu.memory_space<vmem>>, vector<3x32xf32>
    %c6 = arith.constant 6 : index
    %c0_8 = arith.constant 0 : index
    %6 = vector.load %arg2[%c6, %c0_8] : memref<8x32xf32, #tpu.memory_space<vmem>>, vector<1x32xf32>
    %c7 = arith.constant 7 : index
    %c0_9 = arith.constant 0 : index
    %7 = vector.load %arg2[%c7, %c0_9] : memref<8x32xf32, #tpu.memory_space<vmem>>, vector<1x32xf32>
    %cst = arith.constant dense<0.000000e+00> : vector<128x32xf32>
    %8 = tpu.matmul %1, %4, %cst {dimension_numbers = #tpu.dot_dimension_numbers<[1], [0], [0], [1], [0, 0, 1, 1], [], []>} : vector<128x3xf32>, vector<3x32xf32>, vector<128x32xf32> -> vector<128x32xf32>
    %cst_10 = arith.constant dense<0.000000e+00> : vector<128x32xf32>
    %9 = tpu.matmul %3, %5, %cst_10 {dimension_numbers = #tpu.dot_dimension_numbers<[1], [0], [0], [1], [0, 0, 1, 1], [], []>} : vector<128x3xf32>, vector<3x32xf32>, vector<128x32xf32> -> vector<128x32xf32>
    %10 = arith.addf %8, %9 : vector<128x32xf32>
    %11 = vector.broadcast %6 : vector<1x32xf32> to vector<128x32xf32>
    %12 = arith.addf %10, %11 : vector<128x32xf32>
    %cst_11 = arith.constant 0.000000e+00 : f32
    %13 = vector.broadcast %cst_11 : f32 to vector<128x32xf32>
    %14 = arith.maximumf %12, %13 : vector<128x32xf32>
    %15 = vector.broadcast %7 : vector<1x32xf32> to vector<128x32xf32>
    %16 = arith.mulf %14, %15 : vector<128x32xf32>
    %cst_12 = arith.constant dense<0.000000e+00> : vector<128xf32>
    %17 = vector.multi_reduction <add>, %16, %cst_12 [1] : vector<128x32xf32> to vector<128xf32>
    %18 = vector.shape_cast %17 : vector<128xf32> to vector<128x1xf32>
    %19 = vector.extract_strided_slice %18 {offsets = [0, 0], sizes = [64, 1], strides = [1, 1]} : vector<128x1xf32> to vector<64x1xf32>
    %cst_13 = arith.constant dense<0xFF800000> : vector<1xf32>
    %20 = vector.multi_reduction <maximumf>, %19, %cst_13 [0] : vector<64x1xf32> to vector<1xf32>
    %21 = vector.shape_cast %20 : vector<1xf32> to vector<1x1xf32>
    %22 = vector.broadcast %21 : vector<1x1xf32> to vector<64x1xf32>
    %23 = arith.subf %19, %22 : vector<64x1xf32>
    %24 = math.exp %23 : vector<64x1xf32>
    %cst_14 = arith.constant dense<0.000000e+00> : vector<1xf32>
    %25 = vector.multi_reduction <add>, %24, %cst_14 [0] : vector<64x1xf32> to vector<1xf32>
    %26 = vector.shape_cast %25 : vector<1xf32> to vector<1x1xf32>
    %27 = vector.broadcast %26 : vector<1x1xf32> to vector<64x1xf32>
    %28 = arith.divf %24, %27 : vector<64x1xf32>
    %29 = vector.extract_strided_slice %1 {offsets = [0, 0], sizes = [64, 3], strides = [1, 1]} : vector<128x3xf32> to vector<64x3xf32>
    %30 = vector.broadcast %28 : vector<64x1xf32> to vector<64x3xf32>
    %31 = arith.mulf %29, %30 : vector<64x3xf32>
    %cst_15 = arith.constant dense<0.000000e+00> : vector<3xf32>
    %32 = vector.multi_reduction <add>, %31, %cst_15 [0] : vector<64x3xf32> to vector<3xf32>
    %33 = vector.shape_cast %32 : vector<3xf32> to vector<1x3xf32>
    %34 = vector.extract_strided_slice %18 {offsets = [64, 0], sizes = [64, 1], strides = [1, 1]} : vector<128x1xf32> to vector<64x1xf32>
    %cst_16 = arith.constant dense<0xFF800000> : vector<1xf32>
    %35 = vector.multi_reduction <maximumf>, %34, %cst_16 [0] : vector<64x1xf32> to vector<1xf32>
    %36 = vector.shape_cast %35 : vector<1xf32> to vector<1x1xf32>
    %37 = vector.broadcast %36 : vector<1x1xf32> to vector<64x1xf32>
    %38 = arith.subf %34, %37 : vector<64x1xf32>
    %39 = math.exp %38 : vector<64x1xf32>
    %cst_17 = arith.constant dense<0.000000e+00> : vector<1xf32>
    %40 = vector.multi_reduction <add>, %39, %cst_17 [0] : vector<64x1xf32> to vector<1xf32>
    %41 = vector.shape_cast %40 : vector<1xf32> to vector<1x1xf32>
    %42 = vector.broadcast %41 : vector<1x1xf32> to vector<64x1xf32>
    %43 = arith.divf %39, %42 : vector<64x1xf32>
    %44 = vector.extract_strided_slice %1 {offsets = [64, 0], sizes = [64, 3], strides = [1, 1]} : vector<128x3xf32> to vector<64x3xf32>
    %45 = vector.broadcast %43 : vector<64x1xf32> to vector<64x3xf32>
    %46 = arith.mulf %44, %45 : vector<64x3xf32>
    %cst_18 = arith.constant dense<0.000000e+00> : vector<3xf32>
    %47 = vector.multi_reduction <add>, %46, %cst_18 [0] : vector<64x3xf32> to vector<3xf32>
    %48 = vector.shape_cast %47 : vector<3xf32> to vector<1x3xf32>
    %49 = tpu.concatenate %33, %48 in 0 : vector<1x3xf32>, vector<1x3xf32> -> vector<2x3xf32>
    %c0_19 = arith.constant 0 : index
    %c0_20 = arith.constant 0 : index
    %50 = vector.load %arg3[%c0_19, %c0_20] : memref<2x3xf32, #tpu.memory_space<vmem>>, vector<2x3xf32>
    tpu.vector_store %arg3[%c0_19, %c0_20], %49 {strides = array<i32>} : memref<2x3xf32, #tpu.memory_space<vmem>>, vector<2x3xf32>,
    return
  }
}

</mosaic_0001>

<llo_original>
// kernel: tpu_custom_call.1
$region0: #{tpu_custom_call.1}
  #allocation0 [shape = 'u32[]', space=smem, size = 0x4, offset = 0x4, fixed_abs, tag = 'smem constant byte address 0x4 - core index']
  #allocation1 [shape = 'u32[144,128]{1,0:T(1,128)}', space=vmem, size = 0x12000, scoped, tag = 'internal scratch']
  %s0 = inlined_call_operand.vmem [shape: f32[2,64,3], index: 0, kind: input, shape index: {}]
  %s1 = inlined_call_operand.vmem [shape: f32[2,64,3], index: 1, kind: input, shape index: {}]
  %s2 = inlined_call_operand.vmem [shape: f32[8,32], index: 2, kind: input, shape index: {}]
  %s3 = inlined_call_operand.hbm [shape: f32[2,3], index: 3, kind: output, shape index: {}]
  %s4 = sld [smem:[#allocation0]]
  $region22: #{tpu_custom_call.1} parent=0
    _
  %s6 = ssub.s32 1, %s4
  %s7 = scalar_select 0, %s6, %s4
  $region1: #{tpu_custom_call.1} parent=0
    #allocation2 [shape = 'u8[1024]{0}', space=vmem, size = 0x400, scoped, tag = 'output window, operand 0, single buffered']
    #allocation3 [shape = 's32[1]{0}', space=sflag, size = 0x4, scoped, tag = 'scoped memory for tpu_custom_call.1']
    %8 = vsyncpa [#allocation3], 0
    // Predicated region
    $region2: #{tpu_custom_call.1} parent=1 // pred_check
      _
    $region3: #{tpu_custom_call.1} parent=1 // pred_check_branch
      %10 = sbr.rel (0) target = $region5
    $region4: #{tpu_custom_call.1} parent=1 // pred_region
      _
    $region5: #{tpu_custom_call.1} parent=1 // pred_fallthru
      _
    // Predicated region
    $region6: #{tpu_custom_call.1} parent=1 // pred_check
      _
    $region7: #{tpu_custom_call.1} parent=1 // pred_check_branch
      %12 = sbr.rel (0) target = $region9
    $region8: #{tpu_custom_call.1} parent=1 // pred_region
      _
    $region9: #{tpu_custom_call.1} parent=1 // pred_fallthru
      _
    // Predicated region
    $region10: #{tpu_custom_call.1} parent=1 // pred_check
      _
    $region11: #{tpu_custom_call.1} parent=1 // pred_check_branch
      %14 = sbr.rel (0) target = $region13
    $region12: #{tpu_custom_call.1} parent=1 // pred_region
      _
    $region13: #{tpu_custom_call.1} parent=1 // pred_fallthru
      _
    %v15 = vld [vmem:[%s0] sm:$0xff]
    %v16 = vld [vmem:[%s0 + $0x8] sm:$0xff]
    %v17 = vld [vmem:[%s0 + $0x10] sm:$0xff]
    %v18 = vld [vmem:[%s0 + $0x18] sm:$0xff]
    %v19 = vld [vmem:[%s0 + $0x20] sm:$0xff]
    %v20 = vld [vmem:[%s0 + $0x28] sm:$0xff]
    %v21 = vld [vmem:[%s0 + $0x30] sm:$0xff]
    %v22 = vld [vmem:[%s0 + $0x38] sm:$0xff]
    %v23 = vld [vmem:[%s0 + $0x40] sm:$0xff]
    %v24 = vld [vmem:[%s0 + $0x48] sm:$0xff]
    %v25 = vld [vmem:[%s0 + $0x50] sm:$0xff]
    %v26 = vld [vmem:[%s0 + $0x58] sm:$0xff]
    %v27 = vld [vmem:[%s0 + $0x60] sm:$0xff]
    %v28 = vld [vmem:[%s0 + $0x68] sm:$0xff]
    %v29 = vld [vmem:[%s0 + $0x70] sm:$0xff]
    %v30 = vld [vmem:[%s0 + $0x78] sm:$0xff]
    %v31 = vld [vmem:[%s1] sm:$0xff]
    %v32 = vld [vmem:[%s1 + $0x8] sm:$0xff]
    %v33 = vld [vmem:[%s1 + $0x10] sm:$0xff]
    %v34 = vld [vmem:[%s1 + $0x18] sm:$0xff]
    %v35 = vld [vmem:[%s1 + $0x20] sm:$0xff]
    %v36 = vld [vmem:[%s1 + $0x28] sm:$0xff]
    %v37 = vld [vmem:[%s1 + $0x30] sm:$0xff]
    %v38 = vld [vmem:[%s1 + $0x38] sm:$0xff]
    %v39 = vld [vmem:[%s1 + $0x40] sm:$0xff]
    %v40 = vld [vmem:[%s1 + $0x48] sm:$0xff]
    %v41 = vld [vmem:[%s1 + $0x50] sm:$0xff]
    %v42 = vld [vmem:[%s1 + $0x58] sm:$0xff]
    %v43 = vld [vmem:[%s1 + $0x60] sm:$0xff]
    %v44 = vld [vmem:[%s1 + $0x68] sm:$0xff]
    %v45 = vld [vmem:[%s1 + $0x70] sm:$0xff]
    %v46 = vld [vmem:[%s1 + $0x78] sm:$0xff]
    %v47 = vld [vmem:[%s2] sm:$0x7]
    %v48 = vld [vmem:[%s2 + $0x3] sm:$0x7]
    %v49 = vld [vmem:[%s2 + $0x6] sm:$0x1]
    %v50 = vld [vmem:[%s2 + $0x7] sm:$0x1]
    %vm51 = vcmask 23552
    %v53 = vsel %vm51, %v31, 0
    %v56 = vsel %vm51, %v32, 0
    %v59 = vsel %vm51, %v33, 0
    %v62 = vsel %vm51, %v34, 0
    %v65 = vsel %vm51, %v35, 0
    %v68 = vsel %vm51, %v36, 0
    %v71 = vsel %vm51, %v37, 0
    %v74 = vsel %vm51, %v38, 0
    %v77 = vsel %vm51, %v39, 0
    %v80 = vsel %vm51, %v40, 0
    %v83 = vsel %vm51, %v41, 0
    %v86 = vsel %vm51, %v42, 0
    %v89 = vsel %vm51, %v43, 0
    %v92 = vsel %vm51, %v44, 0
    %v95 = vsel %vm51, %v45, 0
    %v98 = vsel %vm51, %v46, 0
    %vm100 = vcmask 1042432
    %v102 = vsel %vm100, %v48, 0
    %104 = vmatprep.subr.mxu0 0.0
    %105 = vmatpush1.msra.mxu0 %v102
    %106 = vmatprep.subr.mxu0 0.0
    %107 = vmatpush1.msra.mxu0 0.0
    %108 = vmatprep.subr.mxu0 0.0
    %109 = vmatpush1.msra.mxu0 0.0
    %110 = vmatprep.subr.mxu0 0.0
    %111 = vmatpush1.msra.mxu0 0.0
    %112 = vmatprep.subr.mxu0 0.0
    %113 = vmatpush1.msra.mxu0 0.0
    %114 = vmatprep.subr.mxu0 0.0
    %115 = vmatpush1.msra.mxu0 0.0
    %116 = vmatprep.subr.mxu0 0.0
    %117 = vmatpush1.msra.mxu0 0.0
    %118 = vmatprep.subr.mxu0 0.0
    %119 = vmatpush1.msra.mxu0 0.0
    %120 = vmatprep.subr.mxu0 0.0
    %121 = vmatpush1.msra.mxu0 0.0
    %122 = vmatprep.subr.mxu0 0.0
    %123 = vmatpush1.msra.mxu0 0.0
    %124 = vmatprep.subr.mxu0 0.0
    %125 = vmatpush1.msra.mxu0 0.0
    %126 = vmatprep.subr.mxu0 0.0
    %127 = vmatpush1.msra.mxu0 0.0
    %128 = vmatprep.subr.mxu0 0.0
    %129 = vmatpush1.msra.mxu0 0.0
    %130 = vmatprep.subr.mxu0 0.0
    %131 = vmatpush1.msra.mxu0 0.0
    %132 = vmatprep.subr.mxu0 0.0
    %133 = vmatpush1.msra.mxu0 0.0
    %134 = vmatprep.subr.mxu0 0.0
    %135 = vmatpush1.msra.mxu0 0.0
    %136 = vmatprep.subr.mxu0 0.0
    %137 = vmatpush1.msra.mxu0 0.0
    %138 = vmatprep.subr.mxu0 0.0
    %139 = vmatpush1.msra.mxu0 0.0
    %140 = vmatprep.subr.mxu0 0.0
    %141 = vmatpush1.msra.mxu0 0.0
    %142 = vmatprep.subr.mxu0 0.0
    %143 = vmatpush1.msra.mxu0 0.0
    %144 = vmatprep.subr.mxu0 0.0
    %145 = vmatpush1.msra.mxu0 0.0
    %146 = vmatprep.subr.mxu0 0.0
    %147 = vmatpush1.msra.mxu0 0.0
    %148 = vmatprep.subr.mxu0 0.0
    %149 = vmatpush1.msra.mxu0 0.0
    %150 = vmatprep.subr.mxu0 0.0
    %151 = vmatpush1.msra.mxu0 0.0
    %152 = vmatprep.subr.mxu0 0.0
    %153 = vmatpush1.msra.mxu0 0.0
    %154 = vmatprep.subr.mxu0 0.0
    %155 = vmatpush1.msra.mxu0 0.0
    %156 = vmatprep.subr.mxu0 0.0
    %157 = vmatpush1.msra.mxu0 0.0
    %158 = vmatprep.subr.mxu0 0.0
    %159 = vmatpush1.msra.mxu0 0.0
    %160 = vmatprep.subr.mxu0 0.0
    %161 = vmatpush1.msra.mxu0 0.0
    %162 = vmatprep.subr.mxu0 0.0
    %163 = vmatpush1.msra.mxu0 0.0
    %164 = vmatprep.subr.mxu0 0.0
    %165 = vmatpush1.msra.mxu0 0.0
    %166 = vmatprep.subr.mxu0 0.0
    %167 = vmatpush1.msra.mxu0 0.0
    %168 = vmatprep.mubr.f32.mxu0 0.0
    %169 = vmatmul.mubr.f32.gmra.mrb[0].mxu0 %v53
    %v170 = vpop.f32.mrb[0].mxu0
    %v171 = vadd.f32 0.0, %v170
    %v172 = vpop.f32.mrb[0].mxu0
    %173 = vmatprep.mubr.f32.mxu0 0.0
    %174 = vmatmul.mubr.f32.gmra.mrb[0].mxu0 %v56
    %v175 = vpop.f32.mrb[0].mxu0
    %v176 = vadd.f32 0.0, %v175
    %v177 = vpop.f32.mrb[0].mxu0
    %178 = vmatprep.mubr.f32.mxu0 0.0
    %179 = vmatmul.mubr.f32.gmra.mrb[0].mxu0 %v59
    %v180 = vpop.f32.mrb[0].mxu0
    %v181 = vadd.f32 0.0, %v180
    %v182 = vpop.f32.mrb[0].mxu0
    %183 = vmatprep.mubr.f32.mxu0 0.0
    %184 = vmatmul.mubr.f32.gmra.mrb[0].mxu0 %v62
    %v185 = vpop.f32.mrb[0].mxu0
    %v186 = vadd.f32 0.0, %v185
    %v187 = vpop.f32.mrb[0].mxu0
    %188 = vmatprep.mubr.f32.mxu0 0.0
    %189 = vmatmul.mubr.f32.gmra.mrb[0].mxu0 %v65
    %v190 = vpop.f32.mrb[0].mxu0
    %v191 = vadd.f32 0.0, %v190
    %v192 = vpop.f32.mrb[0].mxu0
    %193 = vmatprep.mubr.f32.mxu0 0.0
    %194 = vmatmul.mubr.f32.gmra.mrb[0].mxu0 %v68
    %v195 = vpop.f32.mrb[0].mxu0
    %v196 = vadd.f32 0.0, %v195
    %v197 = vpop.f32.mrb[0].mxu0
    %198 = vmatprep.mubr.f32.mxu0 0.0
    %199 = vmatmul.mubr.f32.gmra.mrb[0].mxu0 %v71
    %v200 = vpop.f32.mrb[0].mxu0
    %v201 = vadd.f32 0.0, %v200
    %v202 = vpop.f32.mrb[0].mxu0
    %203 = vmatprep.mubr.f32.mxu0 0.0
    %204 = vmatmul.mubr.f32.gmra.mrb[0].mxu0 %v74
    %v205 = vpop.f32.mrb[0].mxu0
    %v206 = vadd.f32 0.0, %v205
    %v207 = vpop.f32.mrb[0].mxu0
    %208 = vmatprep.mubr.f32.mxu0 0.0
    %209 = vmatmul.mubr.f32.gmra.mrb[0].mxu0 %v77
    %v210 = vpop.f32.mrb[0].mxu0
    %v211 = vadd.f32 0.0, %v210
    %v212 = vpop.f32.mrb[0].mxu0
    %213 = vmatprep.mubr.f32.mxu0 0.0
    %214 = vmatmul.mubr.f32.gmra.mrb[0].mxu0 %v80
    %v215 = vpop.f32.mrb[0].mxu0
    %v216 = vadd.f32 0.0, %v215
    %v217 = vpop.f32.mrb[0].mxu0
    %218 = vmatprep.mubr.f32.mxu0 0.0
    %219 = vmatmul.mubr.f32.gmra.mrb[0].mxu0 %v83
    %v220 = vpop.f32.mrb[0].mxu0
    %v221 = vadd.f32 0.0, %v220
    %v222 = vpop.f32.mrb[0].mxu0
    %223 = vmatprep.mubr.f32.mxu0 0.0
    %224 = vmatmul.mubr.f32.gmra.mrb[0].mxu0 %v86
    %v225 = vpop.f32.mrb[0].mxu0
    %v226 = vadd.f32 0.0, %v225
    %v227 = vpop.f32.mrb[0].mxu0
    %228 = vmatprep.mubr.f32.mxu0 0.0
    %229 = vmatmul.mubr.f32.gmra.mrb[0].mxu0 %v89
    %v230 = vpop.f32.mrb[0].mxu0
    %v231 = vadd.f32 0.0, %v230
    %v232 = vpop.f32.mrb[0].mxu0
    %233 = vmatprep.mubr.f32.mxu0 0.0
    %234 = vmatmul.mubr.f32.gmra.mrb[0].mxu0 %v92
    %v235 = vpop.f32.mrb[0].mxu0
    %v236 = vadd.f32 0.0, %v235
    %v237 = vpop.f32.mrb[0].mxu0
    %238 = vmatprep.mubr.f32.mxu0 0.0
    %239 = vmatmul.mubr.f32.gmra.mrb[0].mxu0 %v95
    %v240 = vpop.f32.mrb[0].mxu0
    %v241 = vadd.f32 0.0, %v240
    %v242 = vpop.f32.mrb[0].mxu0
    %243 = vmatprep.mubr.f32.mxu0 0.0
    %244 = vmatmul.mubr.f32.gmra.mrb[0].mxu0 %v98
    %v245 = vpop.f32.mrb[0].mxu0
    %v246 = vadd.f32 0.0, %v245
    %v247 = vpop.f32.mrb[0].mxu0
    %248 = vdwg.mxu0
    %v250 = vsel %vm51, %v15, 0
    %v253 = vsel %vm51, %v16, 0
    %v256 = vsel %vm51, %v17, 0
    %v259 = vsel %vm51, %v18, 0
    %v262 = vsel %vm51, %v19, 0
    %v265 = vsel %vm51, %v20, 0
    %v268 = vsel %vm51, %v21, 0
    %v271 = vsel %vm51, %v22, 0
    %v274 = vsel %vm51, %v23, 0
    %v277 = vsel %vm51, %v24, 0
    %v280 = vsel %vm51, %v25, 0
    %v283 = vsel %vm51, %v26, 0
    %v286 = vsel %vm51, %v27, 0
    %v289 = vsel %vm51, %v28, 0
    %v292 = vsel %vm51, %v29, 0
    %v295 = vsel %vm51, %v30, 0
    %v298 = vsel %vm100, %v47, 0
    %300 = vmatprep.subr.mxu0 0.0
    %301 = vmatpush1.msra.mxu0 %v298
    %302 = vmatprep.subr.mxu0 0.0
    %303 = vmatpush1.msra.mxu0 0.0
    %304 = vmatprep.subr.mxu0 0.0
    %305 = vmatpush1.msra.mxu0 0.0
    %306 = vmatprep.subr.mxu0 0.0
    %307 = vmatpush1.msra.mxu0 0.0
    %308 = vmatprep.subr.mxu0 0.0
    %309 = vmatpush1.msra.mxu0 0.0
    %310 = vmatprep.subr.mxu0 0.0
    %311 = vmatpush1.msra.mxu0 0.0
    %312 = vmatprep.subr.mxu0 0.0
    %313 = vmatpush1.msra.mxu0 0.0
    %314 = vmatprep.subr.mxu0 0.0
    %315 = vmatpush1.msra.mxu0 0.0
    %316 = vmatprep.subr.mxu0 0.0
    %317 = vmatpush1.msra.mxu0 0.0
    %318 = vmatprep.subr.mxu0 0.0
    %319 = vmatpush1.msra.mxu0 0.0
    %320 = vmatprep.subr.mxu0 0.0
    %321 = vmatpush1.msra.mxu0 0.0
    %322 = vmatprep.subr.mxu0 0.0
    %323 = vmatpush1.msra.mxu0 0.0
    %324 = vmatprep.subr.mxu0 0.0
    %325 = vmatpush1.msra.mxu0 0.0
    %326 = vmatprep.subr.mxu0 0.0
    %327 = vmatpush1.msra.mxu0 0.0
    %328 = vmatprep.subr.mxu0 0.0
    %329 = vmatpush1.msra.mxu0 0.0
    %330 = vmatprep.subr.mxu0 0.0
    %331 = vmatpush1.msra.mxu0 0.0
    %332 = vmatprep.subr.mxu0 0.0
    %333 = vmatpush1.msra.mxu0 0.0
    %334 = vmatprep.subr.mxu0 0.0
    %335 = vmatpush1.msra.mxu0 0.0
    %336 = vmatprep.subr.mxu0 0.0
    %337 = vmatpush1.msra.mxu0 0.0
    %338 = vmatprep.subr.mxu0 0.0
    %339 = vmatpush1.msra.mxu0 0.0
    %340 = vmatprep.subr.mxu0 0.0
    %341 = vmatpush1.msra.mxu0 0.0
    %342 = vmatprep.subr.mxu0 0.0
    %343 = vmatpush1.msra.mxu0 0.0
    %344 = vmatprep.subr.mxu0 0.0
    %345 = vmatpush1.msra.mxu0 0.0
    %346 = vmatprep.subr.mxu0 0.0
    %347 = vmatpush1.msra.mxu0 0.0
    %348 = vmatprep.subr.mxu0 0.0
    %349 = vmatpush1.msra.mxu0 0.0
    %350 = vmatprep.subr.mxu0 0.0
    %351 = vmatpush1.msra.mxu0 0.0
    %352 = vmatprep.subr.mxu0 0.0
    %353 = vmatpush1.msra.mxu0 0.0
    %354 = vmatprep.subr.mxu0 0.0
    %355 = vmatpush1.msra.mxu0 0.0
    %356 = vmatprep.subr.mxu0 0.0
    %357 = vmatpush1.msra.mxu0 0.0
    %358 = vmatprep.subr.mxu0 0.0
    %359 = vmatpush1.msra.mxu0 0.0
    %360 = vmatprep.subr.mxu0 0.0
    %361 = vmatpush1.msra.mxu0 0.0
    %362 = vmatprep.subr.mxu0 0.0
    %363 = vmatpush1.msra.mxu0 0.0
    %364 = vmatprep.mubr.f32.mxu0 0.0
    %365 = vmatmul.mubr.f32.gmra.mrb[0].mxu0 %v250
    %v366 = vpop.f32.mrb[0].mxu0
    %v367 = vadd.f32 %v171, %v366
    %v368 = vpop.f32.mrb[0].mxu0
    %369 = vmatprep.mubr.f32.mxu0 0.0
    %370 = vmatmul.mubr.f32.gmra.mrb[0].mxu0 %v253
    %v371 = vpop.f32.mrb[0].mxu0
    %v372 = vadd.f32 %v176, %v371
    %v373 = vpop.f32.mrb[0].mxu0
    %374 = vmatprep.mubr.f32.mxu0 0.0
    %375 = vmatmul.mubr.f32.gmra.mrb[0].mxu0 %v256
    %v376 = vpop.f32.mrb[0].mxu0
    %v377 = vadd.f32 %v181, %v376
    %v378 = vpop.f32.mrb[0].mxu0
    %379 = vmatprep.mubr.f32.mxu0 0.0
    %380 = vmatmul.mubr.f32.gmra.mrb[0].mxu0 %v259
    %v381 = vpop.f32.mrb[0].mxu0
    %v382 = vadd.f32 %v186, %v381
    %v383 = vpop.f32.mrb[0].mxu0
    %384 = vmatprep.mubr.f32.mxu0 0.0
    %385 = vmatmul.mubr.f32.gmra.mrb[0].mxu0 %v262
    %v386 = vpop.f32.mrb[0].mxu0
    %v387 = vadd.f32 %v191, %v386
    %v388 = vpop.f32.mrb[0].mxu0
    %389 = vmatprep.mubr.f32.mxu0 0.0
    %390 = vmatmul.mubr.f32.gmra.mrb[0].mxu0 %v265
    %v391 = vpop.f32.mrb[0].mxu0
    %v392 = vadd.f32 %v196, %v391
    %v393 = vpop.f32.mrb[0].mxu0
    %394 = vmatprep.mubr.f32.mxu0 0.0
    %395 = vmatmul.mubr.f32.gmra.mrb[0].mxu0 %v268
    %v396 = vpop.f32.mrb[0].mxu0
    %v397 = vadd.f32 %v201, %v396
    %v398 = vpop.f32.mrb[0].mxu0
    %399 = vmatprep.mubr.f32.mxu0 0.0
    %400 = vmatmul.mubr.f32.gmra.mrb[0].mxu0 %v271
    %v401 = vpop.f32.mrb[0].mxu0
    %v402 = vadd.f32 %v206, %v401
    %v403 = vpop.f32.mrb[0].mxu0
    %404 = vmatprep.mubr.f32.mxu0 0.0
    %405 = vmatmul.mubr.f32.gmra.mrb[0].mxu0 %v274
    %v406 = vpop.f32.mrb[0].mxu0
    %v407 = vadd.f32 %v211, %v406
    %v408 = vpop.f32.mrb[0].mxu0
    %409 = vmatprep.mubr.f32.mxu0 0.0
    %410 = vmatmul.mubr.f32.gmra.mrb[0].mxu0 %v277
    %v411 = vpop.f32.mrb[0].mxu0
    %v412 = vadd.f32 %v216, %v411
    %v413 = vpop.f32.mrb[0].mxu0
    %414 = vmatprep.mubr.f32.mxu0 0.0
    %415 = vmatmul.mubr.f32.gmra.mrb[0].mxu0 %v280
    %v416 = vpop.f32.mrb[0].mxu0
    %v417 = vadd.f32 %v221, %v416
    %v418 = vpop.f32.mrb[0].mxu0
    %419 = vmatprep.mubr.f32.mxu0 0.0
    %420 = vmatmul.mubr.f32.gmra.mrb[0].mxu0 %v283
    %v421 = vpop.f32.mrb[0].mxu0
    %v422 = vadd.f32 %v226, %v421
    %v423 = vpop.f32.mrb[0].mxu0
    %424 = vmatprep.mubr.f32.mxu0 0.0
    %425 = vmatmul.mubr.f32.gmra.mrb[0].mxu0 %v286
    %v426 = vpop.f32.mrb[0].mxu0
    %v427 = vadd.f32 %v231, %v426
    %v428 = vpop.f32.mrb[0].mxu0
    %429 = vmatprep.mubr.f32.mxu0 0.0
    %430 = vmatmul.mubr.f32.gmra.mrb[0].mxu0 %v289
    %v431 = vpop.f32.mrb[0].mxu0
    %v432 = vadd.f32 %v236, %v431
    %v433 = vpop.f32.mrb[0].mxu0
    %434 = vmatprep.mubr.f32.mxu0 0.0
    %435 = vmatmul.mubr.f32.gmra.mrb[0].mxu0 %v292
    %v436 = vpop.f32.mrb[0].mxu0
    %v437 = vadd.f32 %v241, %v436
    %v438 = vpop.f32.mrb[0].mxu0
    %439 = vmatprep.mubr.f32.mxu0 0.0
    %440 = vmatmul.mubr.f32.gmra.mrb[0].mxu0 %v295
    %v441 = vpop.f32.mrb[0].mxu0
    %v442 = vadd.f32 %v246, %v441
    %v443 = vpop.f32.mrb[0].mxu0
    %444 = vdwg.mxu0
    %v445 = vlaneseq
    %v446 = vshrl.u32 %v445, 7
    %v447 = vsub.s32 0, %v446
    %v448 = vrot.slane %v49, %v447
    %v449 = vadd.f32 %v367, %v448
    %v450 = vadd.f32 %v372, %v448
    %v451 = vadd.f32 %v377, %v448
    %v452 = vadd.f32 %v382, %v448
    %v453 = vadd.f32 %v387, %v448
    %v454 = vadd.f32 %v392, %v448
    %v455 = vadd.f32 %v397, %v448
    %v456 = vadd.f32 %v402, %v448
    %v457 = vadd.f32 %v407, %v448
    %v458 = vadd.f32 %v412, %v448
    %v459 = vadd.f32 %v417, %v448
    %v460 = vadd.f32 %v422, %v448
    %v461 = vadd.f32 %v427, %v448
    %v462 = vadd.f32 %v432, %v448
    %v463 = vadd.f32 %v437, %v448
    %v464 = vadd.f32 %v442, %v448
    %v465 = vmax.f32 %v449, 0.0
    %v466 = vmax.f32 %v450, 0.0
    %v467 = vmax.f32 %v451, 0.0
    %v468 = vmax.f32 %v452, 0.0
    %v469 = vmax.f32 %v453, 0.0
    %v470 = vmax.f32 %v454, 0.0
    %v471 = vmax.f32 %v455, 0.0
    %v472 = vmax.f32 %v456, 0.0
    %v473 = vmax.f32 %v457, 0.0
    %v474 = vmax.f32 %v458, 0.0
    %v475 = vmax.f32 %v459, 0.0
    %v476 = vmax.f32 %v460, 0.0
    %v477 = vmax.f32 %v461, 0.0
    %v478 = vmax.f32 %v462, 0.0
    %v479 = vmax.f32 %v463, 0.0
    %v480 = vmax.f32 %v464, 0.0
    %v481 = vlaneseq
    %v482 = vshrl.u32 %v481, 7
    %v483 = vsub.s32 0, %v482
    %v484 = vrot.slane %v50, %v483
    %v485 = vmul.f32 %v465, %v484
    %v486 = vmul.f32 %v466, %v484
    %v487 = vmul.f32 %v467, %v484
    %v488 = vmul.f32 %v468, %v484
    %v489 = vmul.f32 %v469, %v484
    %v490 = vmul.f32 %v470, %v484
    %v491 = vmul.f32 %v471, %v484
    %v492 = vmul.f32 %v472, %v484
    %v493 = vmul.f32 %v473, %v484
    %v494 = vmul.f32 %v474, %v484
    %v495 = vmul.f32 %v475, %v484
    %v496 = vmul.f32 %v476, %v484
    %v497 = vmul.f32 %v477, %v484
    %v498 = vmul.f32 %v478, %v484
    %v499 = vmul.f32 %v479, %v484
    %v500 = vmul.f32 %v480, %v484
    %vm501 = vcmask 261120
    %v502 = vsel %vm501, %v485, 0.0
    %503 = vadd.xlane.f32.xlu0 %v502
    %v504 = vpop.xlane.xlu0 %503
    %v505 = vsel %vm501, %v486, 0.0
    %506 = vadd.xlane.f32.xlu0 %v505
    %v507 = vpop.xlane.xlu0 %506
    %v508 = vsel %vm501, %v487, 0.0
    %509 = vadd.xlane.f32.xlu0 %v508
    %v510 = vpop.xlane.xlu0 %509
    %v511 = vsel %vm501, %v488, 0.0
    %512 = vadd.xlane.f32.xlu0 %v511
    %v513 = vpop.xlane.xlu0 %512
    %v514 = vsel %vm501, %v489, 0.0
    %515 = vadd.xlane.f32.xlu0 %v514
    %v516 = vpop.xlane.xlu0 %515
    %v517 = vsel %vm501, %v490, 0.0
    %518 = vadd.xlane.f32.xlu0 %v517
    %v519 = vpop.xlane.xlu0 %518
    %v520 = vsel %vm501, %v491, 0.0
    %521 = vadd.xlane.f32.xlu0 %v520
    %v522 = vpop.xlane.xlu0 %521
    %v523 = vsel %vm501, %v492, 0.0
    %524 = vadd.xlane.f32.xlu0 %v523
    %v525 = vpop.xlane.xlu0 %524
    %v526 = vsel %vm501, %v493, 0.0
    %527 = vadd.xlane.f32.xlu0 %v526
    %v528 = vpop.xlane.xlu0 %527
    %v529 = vsel %vm501, %v494, 0.0
    %530 = vadd.xlane.f32.xlu0 %v529
    %v531 = vpop.xlane.xlu0 %530
    %v532 = vsel %vm501, %v495, 0.0
    %533 = vadd.xlane.f32.xlu0 %v532
    %v534 = vpop.xlane.xlu0 %533
    %v535 = vsel %vm501, %v496, 0.0
    %536 = vadd.xlane.f32.xlu0 %v535
    %v537 = vpop.xlane.xlu0 %536
    %v538 = vsel %vm501, %v497, 0.0
    %539 = vadd.xlane.f32.xlu0 %v538
    %v540 = vpop.xlane.xlu0 %539
    %v541 = vsel %vm501, %v498, 0.0
    %542 = vadd.xlane.f32.xlu0 %v541
    %v543 = vpop.xlane.xlu0 %542
    %v544 = vsel %vm501, %v499, 0.0
    %545 = vadd.xlane.f32.xlu0 %v544
    %v546 = vpop.xlane.xlu0 %545
    %v547 = vsel %vm501, %v500, 0.0
    %548 = vadd.xlane.f32.xlu0 %v547
    %v549 = vpop.xlane.xlu0 %548
    %v550 = vmax.f32 %v504, %v516
    %v551 = vmax.f32 %v507, %v519
    %v552 = vmax.f32 %v510, %v522
    %v553 = vmax.f32 %v513, %v525
    %v554 = vmax.f32 %v550, %v551
    %v555 = vmax.f32 %v552, %v553
    %v556 = vmax.f32 %v554, %v555
    %v557 = vrot.slane %v556, 4
    %v558 = vmax.f32 %v556, %v557
    %v559 = vrot.slane %v558, 2
    %v560 = vmax.f32 %v558, %v559
    %v561 = vrot.slane %v560, 1
    %v562 = vmax.f32 %v560, %v561
    %v563 = vsub.f32 %v504, %v562
    %v564 = vsub.f32 %v507, %v562
    %v565 = vsub.f32 %v510, %v562
    %v566 = vsub.f32 %v513, %v562
    %v567 = vsub.f32 %v516, %v562
    %v568 = vsub.f32 %v519, %v562
    %v569 = vsub.f32 %v522, %v562
    %v570 = vsub.f32 %v525, %v562
    %v571 = vmul.f32 %v563, 1.442695
    %v572 = vpow.pop %v571
    %v573 = vmul.f32 %v564, 1.442695
    %v574 = vpow.pop %v573
    %v575 = vmul.f32 %v565, 1.442695
    %v576 = vpow.pop %v575
    %v577 = vmul.f32 %v566, 1.442695
    %v578 = vpow.pop %v577
    %v579 = vmul.f32 %v567, 1.442695
    %v580 = vpow.pop %v579
    %v581 = vmul.f32 %v568, 1.442695
    %v582 = vpow.pop %v581
    %v583 = vmul.f32 %v569, 1.442695
    %v584 = vpow.pop %v583
    %v585 = vmul.f32 %v570, 1.442695
    %v586 = vpow.pop %v585
    %v587 = vadd.f32 %v572, %v574
    %v588 = vadd.f32 %v587, %v576
    %v589 = vadd.f32 %v588, %v578
    %v590 = vadd.f32 %v589, %v580
    %v591 = vadd.f32 %v590, %v582
    %v592 = vadd.f32 %v591, %v584
    %v593 = vadd.f32 %v592, %v586
    %v594 = vrot.slane %v593, 4
    %v595 = vadd.f32 %v593, %v594
    %v596 = vrot.slane %v595, 2
    %v597 = vadd.f32 %v595, %v596
    %v598 = vrot.slane %v597, 1
    %v599 = vadd.f32 %v597, %v598
    %v600 = vrcp.pop %v599
    %v601 = vmul.f32 %v572, %v600
    %v602 = vmul.f32 %v574, %v600
    %v603 = vmul.f32 %v576, %v600
    %v604 = vmul.f32 %v578, %v600
    %v605 = vmul.f32 %v580, %v600
    %v606 = vmul.f32 %v582, %v600
    %v607 = vmul.f32 %v584, %v600
    %v608 = vmul.f32 %v586, %v600
    %v609 = vmul.f32 %v15, %v601
    %v610 = vmul.f32 %v16, %v602
    %v611 = vmul.f32 %v17, %v603
    %v612 = vmul.f32 %v18, %v604
    %v613 = vmul.f32 %v19, %v605
    %v614 = vmul.f32 %v20, %v606
    %v615 = vmul.f32 %v21, %v607
    %v616 = vmul.f32 %v22, %v608
    %v617 = vsel %vm51, %v609, 0.0
    %v618 = vsel %vm51, %v610, 0.0
    %v619 = vadd.f32 %v617, %v618
    %v620 = vsel %vm51, %v611, 0.0
    %v621 = vadd.f32 %v619, %v620
    %v622 = vsel %vm51, %v612, 0.0
    %v623 = vadd.f32 %v621, %v622
    %v624 = vsel %vm51, %v613, 0.0
    %v625 = vadd.f32 %v623, %v624
    %v626 = vsel %vm51, %v614, 0.0
    %v627 = vadd.f32 %v625, %v626
    %v628 = vsel %vm51, %v615, 0.0
    %v629 = vadd.f32 %v627, %v628
    %v630 = vsel %vm51, %v616, 0.0
    %v631 = vadd.f32 %v629, %v630
    %v632 = vrot.slane %v631, 4
    %v633 = vadd.f32 %v631, %v632
    %v634 = vrot.slane %v633, 2
    %v635 = vadd.f32 %v633, %v634
    %v636 = vrot.slane %v635, 1
    %v637 = vadd.f32 %v635, %v636
    %v638 = vmax.f32 %v528, %v540
    %v639 = vmax.f32 %v531, %v543
    %v640 = vmax.f32 %v534, %v546
    %v641 = vmax.f32 %v537, %v549
    %v642 = vmax.f32 %v638, %v639
    %v643 = vmax.f32 %v640, %v641
    %v644 = vmax.f32 %v642, %v643
    %v645 = vrot.slane %v644, 4
    %v646 = vmax.f32 %v644, %v645
    %v647 = vrot.slane %v646, 2
    %v648 = vmax.f32 %v646, %v647
    %v649 = vrot.slane %v648, 1
    %v650 = vmax.f32 %v648, %v649
    %v651 = vsub.f32 %v528, %v650
    %v652 = vsub.f32 %v531, %v650
    %v653 = vsub.f32 %v534, %v650
    %v654 = vsub.f32 %v537, %v650
    %v655 = vsub.f32 %v540, %v650
    %v656 = vsub.f32 %v543, %v650
    %v657 = vsub.f32 %v546, %v650
    %v658 = vsub.f32 %v549, %v650
    %v659 = vmul.f32 %v651, 1.442695
    %v660 = vpow.pop %v659
    %v661 = vmul.f32 %v652, 1.442695
    %v662 = vpow.pop %v661
    %v663 = vmul.f32 %v653, 1.442695
    %v664 = vpow.pop %v663
    %v665 = vmul.f32 %v654, 1.442695
    %v666 = vpow.pop %v665
    %v667 = vmul.f32 %v655, 1.442695
    %v668 = vpow.pop %v667
    %v669 = vmul.f32 %v656, 1.442695
    %v670 = vpow.pop %v669
    %v671 = vmul.f32 %v657, 1.442695
    %v672 = vpow.pop %v671
    %v673 = vmul.f32 %v658, 1.442695
    %v674 = vpow.pop %v673
    %v675 = vadd.f32 %v660, %v662
    %v676 = vadd.f32 %v675, %v664
    %v677 = vadd.f32 %v676, %v666
    %v678 = vadd.f32 %v677, %v668
    %v679 = vadd.f32 %v678, %v670
    %v680 = vadd.f32 %v679, %v672
    %v681 = vadd.f32 %v680, %v674
    %v682 = vrot.slane %v681, 4
    %v683 = vadd.f32 %v681, %v682
    %v684 = vrot.slane %v683, 2
    %v685 = vadd.f32 %v683, %v684
    %v686 = vrot.slane %v685, 1
    %v687 = vadd.f32 %v685, %v686
    %v688 = vrcp.pop %v687
    %v689 = vmul.f32 %v660, %v688
    %v690 = vmul.f32 %v662, %v688
    %v691 = vmul.f32 %v664, %v688
    %v692 = vmul.f32 %v666, %v688
    %v693 = vmul.f32 %v668, %v688
    %v694 = vmul.f32 %v670, %v688
    %v695 = vmul.f32 %v672, %v688
    %v696 = vmul.f32 %v674, %v688
    %v697 = vmul.f32 %v23, %v689
    %v698 = vmul.f32 %v24, %v690
    %v699 = vmul.f32 %v25, %v691
    %v700 = vmul.f32 %v26, %v692
    %v701 = vmul.f32 %v27, %v693
    %v702 = vmul.f32 %v28, %v694
    %v703 = vmul.f32 %v29, %v695
    %v704 = vmul.f32 %v30, %v696
    %v705 = vsel %vm51, %v697, 0.0
    %v706 = vsel %vm51, %v698, 0.0
    %v707 = vadd.f32 %v705, %v706
    %v708 = vsel %vm51, %v699, 0.0
    %v709 = vadd.f32 %v707, %v708
    %v710 = vsel %vm51, %v700, 0.0
    %v711 = vadd.f32 %v709, %v710
    %v712 = vsel %vm51, %v701, 0.0
    %v713 = vadd.f32 %v711, %v712
    %v714 = vsel %vm51, %v702, 0.0
    %v715 = vadd.f32 %v713, %v714
    %v716 = vsel %vm51, %v703, 0.0
    %v717 = vadd.f32 %v715, %v716
    %v718 = vsel %vm51, %v704, 0.0
    %v719 = vadd.f32 %v717, %v718
    %v720 = vrot.slane %v719, 4
    %v721 = vadd.f32 %v719, %v720
    %v722 = vrot.slane %v721, 2
    %v723 = vadd.f32 %v721, %v722
    %v724 = vrot.slane %v723, 1
    %v725 = vadd.f32 %v723, %v724
    %vm726 = vcmask 1040384
    %v727 = vsel %vm726, %v637, %v725
    %vm728 = vcmask 17408
    %729 = vst.msk [vmem:[#allocation2] sm:$0x3] %vm728, %v727
    // Predicated region
    $region14: #{tpu_custom_call.1} parent=1 // pred_check
      _
    $region15: #{tpu_custom_call.1} parent=1 // pred_check_branch
      %731 = sbr.rel (0) target = $region17
    $region16: #{tpu_custom_call.1} parent=1 // pred_region
      %s733 = ssub.s32 32, 32
      %734 = vsyncadd [#allocation3], %s733
      %s736 = sshll.u32 [#allocation2], 4
      %s737 = int_to_ptr.vmem [resolvable:$true] %s736
      %739 = dma.vmem_to_hbm [thread:$0]  %s737, 32, %s3, [#allocation3]
    $region17: #{tpu_custom_call.1} parent=1 // pred_fallthru
      _
    // Predicated region
    $region18: #{tpu_custom_call.1} parent=1 // pred_check
      _
    $region19: #{tpu_custom_call.1} parent=1 // pred_check_branch
      %741 = sbr.rel (0) target = $region21
    $region20: #{tpu_custom_call.1} parent=1 // pred_region
      %742 = dma.done [#allocation3], 32
    $region21: #{tpu_custom_call.1} parent=1 // pred_fallthru
      _
    %743 = vsyncpa [#allocation3], 1

</llo_original>
